<compile_context>
chip_gen: v7x
topology: tpu7x:2x2x1
jax: 0.10.0
libtpu: 0.0.40
codegen_flags: <defaults>
</compile_context>

<pallas_src>
import functools

import jax
import jax.numpy as jnp
from jax import lax
from jax.experimental import pallas as pl
from jax.experimental.pallas import tpu as pltpu


def _round_up(x, m):
    return ((x + m - 1) // m) * m


def _pick_divisor(dim, candidates):
    """Largest candidate that divides dim; fall back to the full extent."""
    for c in candidates:
        if dim % c == 0:
            return c
    return dim


def _linear_kernel(x_ref, w_ref, b_ref, o_ref, acc_ref):
    # x_ref: (tm, tk) native dtype, w_ref: (tn, tk) native dtype (torch (O, F)
    # layout), b_ref: (1, tn), o_ref: (tm, tn) out dtype, acc_ref: (tm, tn) f32.
    k = pl.program_id(2)

    @pl.when(k == 0)
    def _init():
        acc_ref[...] = jnp.zeros_like(acc_ref)

    # x.float() semantics: operands cast to f32 in-kernel (free VPU op),
    # contraction on both last dims (x @ W.T), fp32 accumulation on the MXU.
    acc_ref[...] += lax.dot_general(
        x_ref[...].astype(jnp.float32),
        w_ref[...].astype(jnp.float32),
        dimension_numbers=(((1,), (1,)), ((), ())),
        preferred_element_type=jnp.float32,
    )

    @pl.when(k == pl.num_programs(2) - 1)
    def _finalize():
        # Bias add + (optionally narrow) output cast fused into the kernel.
        o_ref[...] = (acc_ref[...] + b_ref[...].astype(jnp.float32)).astype(
            o_ref.dtype)


def _linear_pallas(x2d, weight, bias, out_dtype, *, tm=512, tk_max=512):
    """y = x2d @ weight.T + bias via a tiled Pallas matmul.

    x2d:    (M, F) any float dtype (cast to f32 inside the kernel)
    weight: (O, F) torch.nn.Linear.weight layout
    bias:   (O,)
    """
    M, F = x2d.shape
    O = weight.shape[0]

    # --- tile selection & padding -------------------------------------------
    tm = _round_up(max(tm, 8), 8)
    tm_eff = min(tm, _round_up(M, 8))          # sublane-aligned row tile
    M_pad = _round_up(M, tm_eff)
    O_pad = _round_up(O, 128)                  # lane-dense output
    tn = _pick_divisor(O_pad, (256, 128))
    tk = _pick_divisor(F, (tk_max, 256, 128))  # falls back to full F

    if M_pad != M:
        x2d = jnp.pad(x2d, ((0, M_pad - M), (0, 0)))
    w, b = weight, bias
    if O_pad != O:
        w = jnp.pad(w, ((0, O_pad - O), (0, 0)))
        b = jnp.pad(b, (0, O_pad - O))
    b2d = b.reshape(1, O_pad)

    grid = (M_pad // tm_eff, O_pad // tn, F // tk)

    y = pl.pallas_call(
        _linear_kernel,
        out_shape=jax.ShapeDtypeStruct((M_pad, O_pad), out_dtype),
        grid_spec=pltpu.PrefetchScalarGridSpec(
            num_scalar_prefetch=0,
            grid=grid,
            in_specs=[
                pl.BlockSpec((tm_eff, tk), lambda i, j, k: (i, k)),
                pl.BlockSpec((tn, tk), lambda i, j, k: (j, k)),
                pl.BlockSpec((1, tn), lambda i, j, k: (0, j)),
            ],
            out_specs=pl.BlockSpec((tm_eff, tn), lambda i, j, k: (i, j)),
            scratch_shapes=[pltpu.VMEM((tm_eff, tn), jnp.float32)],
        ),
        compiler_params=pltpu.CompilerParams(
            dimension_semantics=("parallel", "parallel", "arbitrary")),
    )(x2d, w, b2d)

    if M_pad != M or O_pad != O:
        y = y[:M, :O]
    return y


def time_distributed_linear(x, weight, bias, *, batch_first=False,
                            is_half=False, tm=512):
    """TimeDistributed(Linear(F, O)) forward.

    weight: (O, F) like torch.nn.Linear.weight
    bias:   (O,)
    """
    # Note: for tiny M*F*O a plain jnp.dot would beat the pallas_call launch
    # overhead; a size-threshold dispatch can be added by the caller.
    x = jnp.asarray(x)
    weight = jnp.asarray(weight)
    bias = jnp.asarray(bias)

    if x.ndim <= 2:
        # PyTorch applies the module directly (no explicit .float() here).
        out_dtype = jnp.result_type(x.dtype, weight.dtype)
        x2d = x.reshape(1, -1) if x.ndim == 1 else x
        y = _linear_pallas(x2d, weight, bias, out_dtype, tm=tm)
        if x.ndim == 1:
            y = y.reshape(-1)
        return y

    # ndim > 2: x.float() is fused into the kernel; flatten -> Linear -> reshape.
    F = x.shape[-1]
    x2d = x.reshape(-1, F)                       # native dtype, no fp32 copy
    # is_half -> write float16 straight from the kernel (PyTorch .half()).
    out_dtype = jnp.float16 if is_half else jnp.float32
    y2d = _linear_pallas(x2d, weight, bias, out_dtype, tm=tm)

    O = y2d.shape[-1]
    if batch_first:
        return y2d.reshape(x.shape[0], -1, O)
    return y2d.reshape(-1, x.shape[1], O)


if __name__ == "__main__":
    # Small shapes: seq=8, batch=2, hidden(features)=32, out=64 (time-major x)
    SEQ, BATCH, FEAT, OUT = 8, 2, 32, 64

    key = jax.random.PRNGKey(0)
    kx, kw, kb = jax.random.split(key, 3)

    x = jax.random.normal(kx, (SEQ, BATCH, FEAT), dtype=jnp.float32)
    # torch.nn.Linear parameter shapes: W (O, F), b (O,)
    weight = jax.random.normal(kw, (OUT, FEAT), dtype=jnp.float32) * 0.05
    bias = jax.random.normal(kb, (OUT,), dtype=jnp.float32) * 0.05

    # --- main path: ndim > 2, batch_first=False, fp32 output ----------------
    fwd = jax.jit(functools.partial(time_distributed_linear,
                                    batch_first=False, is_half=False))
    y = jax.block_until_ready(fwd(x, weight, bias))

    y_ref = (x.reshape(-1, FEAT) @ weight.T + bias).reshape(-1, BATCH, OUT)
    assert y.shape == (SEQ, BATCH, OUT), y.shape
    assert y.dtype == jnp.float32, y.dtype
    assert jnp.allclose(y, y_ref, atol=1e-5, rtol=1e-5)

    # --- is_half path: float16 written directly from the kernel -------------
    fwd_h = jax.jit(functools.partial(time_distributed_linear,
                                      batch_first=False, is_half=True))
    y_h = jax.block_until_ready(fwd_h(x, weight, bias))
    assert y_h.dtype == jnp.float16, y_h.dtype
    assert jnp.allclose(y_h.astype(jnp.float32), y_ref, atol=1e-2, rtol=1e-2)

    # --- ndim == 2 branch: module applied directly ---------------------------
    x2 = jax.random.normal(kx, (SEQ * BATCH, FEAT), dtype=jnp.float32)
    y2 = jax.block_until_ready(
        jax.jit(time_distributed_linear)(x2, weight, bias))
    assert jnp.allclose(y2, x2 @ weight.T + bias, atol=1e-5, rtol=1e-5)

    print("KERNEL_OK")
</pallas_src>

<mosaic_0001>
module attributes {stable_mosaic.version = 11 : i64} {
  func.func @_linear_kernel(%arg0: i32, %arg1: i32, %arg2: i32, %arg3: memref<16x32xf32, #tpu.memory_space<vmem>>, %arg4: memref<128x32xf32, #tpu.memory_space<vmem>>, %arg5: memref<1x128xf32, #tpu.memory_space<vmem>>, %arg6: memref<16x128xf32, #tpu.memory_space<vmem>>, %arg7: memref<16x128xf32, #tpu.memory_space<vmem>>) attributes {dimension_semantics = [#tpu.dimension_semantics<parallel>, #tpu.dimension_semantics<parallel>, #tpu.dimension_semantics<arbitrary>], iteration_bounds = array<i64: 1, 1, 1>, scalar_prefetch = 0 : i64, scratch_operands = 1 : i64, tpu.core_type = #tpu.core_type<tc>, window_params = [{transform_indices = @transform_0, window_bounds = array<i64: 16, 32>}, {transform_indices = @transform_1, window_bounds = array<i64: 128, 32>}, {transform_indices = @transform_2, window_bounds = array<i64: 1, 128>}, {transform_indices = @transform_3, window_bounds = array<i64: 16, 128>}]} {
    %c0_i32 = arith.constant 0 : i32
    %0 = arith.cmpi eq, %arg2, %c0_i32 : i32
    %1 = arith.extui %0 : i1 to i32
    %c0_i32_0 = arith.constant 0 : i32
    %2 = arith.cmpi ne, %1, %c0_i32_0 : i32
    scf.if %2 {
      %cst_10 = arith.constant 0.000000e+00 : f32
      %12 = vector.broadcast %cst_10 : f32 to vector<16x128xf32>
      %c0_11 = arith.constant 0 : index
      %c0_12 = arith.constant 0 : index
      %13 = vector.load %arg7[%c0_11, %c0_12] : memref<16x128xf32, #tpu.memory_space<vmem>>, vector<16x128xf32>
      tpu.vector_store %arg7[%c0_11, %c0_12], %12 {strides = array<i32>} : memref<16x128xf32, #tpu.memory_space<vmem>>, vector<16x128xf32>,
    } else {
    }
    %c0 = arith.constant 0 : index
    %c0_1 = arith.constant 0 : index
    %3 = vector.load %arg7[%c0, %c0_1] : memref<16x128xf32, #tpu.memory_space<vmem>>, vector<16x128xf32>
    %c0_2 = arith.constant 0 : index
    %c0_3 = arith.constant 0 : index
    %4 = vector.load %arg3[%c0_2, %c0_3] : memref<16x32xf32, #tpu.memory_space<vmem>>, vector<16x32xf32>
    %c0_4 = arith.constant 0 : index
    %c0_5 = arith.constant 0 : index
    %5 = vector.load %arg4[%c0_4, %c0_5] : memref<128x32xf32, #tpu.memory_space<vmem>>, vector<128x32xf32>
    %cst = arith.constant dense<0.000000e+00> : vector<16x128xf32>
    %6 = tpu.matmul %4, %5, %cst {dimension_numbers = #tpu.dot_dimension_numbers<[1], [1], [0], [0], [0, 0, 1, 0], [], []>} : vector<16x32xf32>, vector<128x32xf32>, vector<16x128xf32> -> vector<16x128xf32>
    %7 = arith.addf %3, %6 : vector<16x128xf32>
    %c0_6 = arith.constant 0 : index
    %c0_7 = arith.constant 0 : index
    %8 = vector.load %arg7[%c0_6, %c0_7] : memref<16x128xf32, #tpu.memory_space<vmem>>, vector<16x128xf32>
    tpu.vector_store %arg7[%c0_6, %c0_7], %7 {strides = array<i32>} : memref<16x128xf32, #tpu.memory_space<vmem>>, vector<16x128xf32>,
    %c0_i32_8 = arith.constant 0 : i32
    %9 = arith.cmpi eq, %arg2, %c0_i32_8 : i32
    %10 = arith.extui %9 : i1 to i32
    %c0_i32_9 = arith.constant 0 : i32
    %11 = arith.cmpi ne, %10, %c0_i32_9 : i32
    scf.if %11 {
      %c0_10 = arith.constant 0 : index
      %c0_11 = arith.constant 0 : index
      %12 = vector.load %arg7[%c0_10, %c0_11] : memref<16x128xf32, #tpu.memory_space<vmem>>, vector<16x128xf32>
      %c0_12 = arith.constant 0 : index
      %c0_13 = arith.constant 0 : index
      %13 = vector.load %arg5[%c0_12, %c0_13] : memref<1x128xf32, #tpu.memory_space<vmem>>, vector<1x128xf32>
      %14 = vector.broadcast %13 : vector<1x128xf32> to vector<16x128xf32>
      %15 = arith.addf %12, %14 : vector<16x128xf32>
      %c0_14 = arith.constant 0 : index
      %c0_15 = arith.constant 0 : index
      %16 = vector.load %arg6[%c0_14, %c0_15] : memref<16x128xf32, #tpu.memory_space<vmem>>, vector<16x128xf32>
      tpu.vector_store %arg6[%c0_14, %c0_15], %15 {strides = array<i32>} : memref<16x128xf32, #tpu.memory_space<vmem>>, vector<16x128xf32>,
    } else {
    }
    return
  }
  func.func @transform_0(%arg0: i32, %arg1: i32, %arg2: i32) -> (i32, i32) {
    %c0_i32 = arith.constant 0 : i32
    return %arg0, %arg2 : i32, i32
  }
  func.func @transform_1(%arg0: i32, %arg1: i32, %arg2: i32) -> (i32, i32) {
    %c0_i32 = arith.constant 0 : i32
    return %arg1, %arg2 : i32, i32
  }
  func.func @transform_2(%arg0: i32, %arg1: i32, %arg2: i32) -> (i32, i32) {
    %c0_i32 = arith.constant 0 : i32
    %c0_i32_0 = arith.constant 0 : i32
    return %c0_i32, %arg1 : i32, i32
  }
  func.func @transform_3(%arg0: i32, %arg1: i32, %arg2: i32) -> (i32, i32) {
    %c0_i32 = arith.constant 0 : i32
    return %arg0, %arg1 : i32, i32
  }
}

</mosaic_0001>

<llo_original>
// kernel: time_distributed_linear.1
$region0: #{time_distributed_linear.1}
  #allocation0 [shape = 'u32[]', space=smem, size = 0x4, offset = 0x4, fixed_abs, tag = 'smem constant byte address 0x4 - core index']
  #allocation1 [shape = 'u32[144,128]{1,0:T(1,128)}', space=vmem, size = 0x12000, scoped, tag = 'internal scratch']
  #allocation2 [shape = 'f32[16,128]{1,0:T(8,128)}', space=vmem, size = 0x2000, scoped, tag = 'scratch operand']
  %s0 = inlined_call_operand.vmem [shape: f32[16,32], index: 0, kind: input, shape index: {}]
  %s1 = inlined_call_operand.vmem [shape: f32[128,32], index: 1, kind: input, shape index: {}]
  %s2 = inlined_call_operand.vmem [shape: f32[1,128], index: 2, kind: input, shape index: {}]
  %s3 = inlined_call_operand.hbm [shape: f32[16,128], index: 3, kind: output, shape index: {}]
  %s4 = sld [smem:[#allocation0]]
  $region30: #{time_distributed_linear.1} parent=0
    _
  %s6 = ssub.s32 1, %s4
  %s7 = scalar_select 0, %s6, %s4
  $region1: #{time_distributed_linear.1} parent=0
    #allocation3 [shape = 'u8[8192]{0}', space=vmem, size = 0x2000, scoped, tag = 'output window, operand 0, single buffered']
    #allocation4 [shape = 's32[1]{0}', space=sflag, size = 0x4, scoped, tag = 'scoped memory for time_distributed_linear.1']
    %8 = vsyncpa [#allocation4], 0
    // Predicated region
    $region2: #{time_distributed_linear.1} parent=1 // pred_check
      _
    $region3: #{time_distributed_linear.1} parent=1 // pred_check_branch
      %10 = sbr.rel (0) target = $region5
    $region4: #{time_distributed_linear.1} parent=1 // pred_region
      _
    $region5: #{time_distributed_linear.1} parent=1 // pred_fallthru
      _
    // Predicated region
    $region6: #{time_distributed_linear.1} parent=1 // pred_check
      _
    $region7: #{time_distributed_linear.1} parent=1 // pred_check_branch
      %12 = sbr.rel (0) target = $region9
    $region8: #{time_distributed_linear.1} parent=1 // pred_region
      _
    $region9: #{time_distributed_linear.1} parent=1 // pred_fallthru
      _
    // Predicated region
    $region10: #{time_distributed_linear.1} parent=1 // pred_check
      _
    $region11: #{time_distributed_linear.1} parent=1 // pred_check_branch
      %14 = sbr.rel (0) target = $region13
    $region12: #{time_distributed_linear.1} parent=1 // pred_region
      _
    $region13: #{time_distributed_linear.1} parent=1 // pred_fallthru
      _
    %p15 = scmp.eq.s32.totalorder 0, 0
    // Predicated region
    $region14: #{time_distributed_linear.1} parent=1 // pred_check
      %p16 = pneg %p15
    $region15: #{time_distributed_linear.1} parent=1 // pred_check_branch
      %18 = sbr.rel (%p16) target = $region17
    $region16: #{time_distributed_linear.1} parent=1 // pred_region
      %19 = vst [vmem:[#allocation2] sm:$0xff] 0.0
      %20 = vst [vmem:[#allocation2 + $0x8] sm:$0xff] 0.0
    $region17: #{time_distributed_linear.1} parent=1 // pred_fallthru
      _
    %v21 = vld [vmem:[#allocation2] sm:$0xff]
    %v22 = vld [vmem:[#allocation2 + $0x8] sm:$0xff]
    %v23 = vld [vmem:[%s0] sm:$0xff]
    %v24 = vld [vmem:[%s0 + $0x8] sm:$0xff]
    %v25 = vld [vmem:[%s1] sm:$0xff]
    %v26 = vld [vmem:[%s1 + $0x8] sm:$0xff]
    %v27 = vld [vmem:[%s1 + $0x10] sm:$0xff]
    %v28 = vld [vmem:[%s1 + $0x18] sm:$0xff]
    %v29 = vld [vmem:[%s1 + $0x20] sm:$0xff]
    %v30 = vld [vmem:[%s1 + $0x28] sm:$0xff]
    %v31 = vld [vmem:[%s1 + $0x30] sm:$0xff]
    %v32 = vld [vmem:[%s1 + $0x38] sm:$0xff]
    %v33 = vld [vmem:[%s1 + $0x40] sm:$0xff]
    %v34 = vld [vmem:[%s1 + $0x48] sm:$0xff]
    %v35 = vld [vmem:[%s1 + $0x50] sm:$0xff]
    %v36 = vld [vmem:[%s1 + $0x58] sm:$0xff]
    %v37 = vld [vmem:[%s1 + $0x60] sm:$0xff]
    %v38 = vld [vmem:[%s1 + $0x68] sm:$0xff]
    %v39 = vld [vmem:[%s1 + $0x70] sm:$0xff]
    %v40 = vld [vmem:[%s1 + $0x78] sm:$0xff]
    %vm41 = vcmask 261120
    %v43 = vsel %vm41, %v23, 0
    %v46 = vsel %vm41, %v24, 0
    %v49 = vsel %vm41, %v25, 0
    %v52 = vsel %vm41, %v26, 0
    %v55 = vsel %vm41, %v27, 0
    %v58 = vsel %vm41, %v28, 0
    %v61 = vsel %vm41, %v29, 0
    %v64 = vsel %vm41, %v30, 0
    %v67 = vsel %vm41, %v31, 0
    %v70 = vsel %vm41, %v32, 0
    %v73 = vsel %vm41, %v33, 0
    %v76 = vsel %vm41, %v34, 0
    %v79 = vsel %vm41, %v35, 0
    %v82 = vsel %vm41, %v36, 0
    %v85 = vsel %vm41, %v37, 0
    %v88 = vsel %vm41, %v38, 0
    %v91 = vsel %vm41, %v39, 0
    %v94 = vsel %vm41, %v40, 0
    %96 = vmatprep.subr.mxu0 0.0
    %97 = vmatpush1.xpose.msra.mxu0 %v49
    %98 = vmatprep.subr.mxu0 0.0
    %99 = vmatpush1.xpose.msra.mxu0 %v52
    %100 = vmatprep.subr.mxu0 0.0
    %101 = vmatpush1.xpose.msra.mxu0 %v55
    %102 = vmatprep.subr.mxu0 0.0
    %103 = vmatpush1.xpose.msra.mxu0 %v58
    %104 = vmatprep.subr.mxu0 0.0
    %105 = vmatpush1.xpose.msra.mxu0 %v61
    %106 = vmatprep.subr.mxu0 0.0
    %107 = vmatpush1.xpose.msra.mxu0 %v64
    %108 = vmatprep.subr.mxu0 0.0
    %109 = vmatpush1.xpose.msra.mxu0 %v67
    %110 = vmatprep.subr.mxu0 0.0
    %111 = vmatpush1.xpose.msra.mxu0 %v70
    %112 = vmatprep.subr.mxu0 0.0
    %113 = vmatpush1.xpose.msra.mxu0 %v73
    %114 = vmatprep.subr.mxu0 0.0
    %115 = vmatpush1.xpose.msra.mxu0 %v76
    %116 = vmatprep.subr.mxu0 0.0
    %117 = vmatpush1.xpose.msra.mxu0 %v79
    %118 = vmatprep.subr.mxu0 0.0
    %119 = vmatpush1.xpose.msra.mxu0 %v82
    %120 = vmatprep.subr.mxu0 0.0
    %121 = vmatpush1.xpose.msra.mxu0 %v85
    %122 = vmatprep.subr.mxu0 0.0
    %123 = vmatpush1.xpose.msra.mxu0 %v88
    %124 = vmatprep.subr.mxu0 0.0
    %125 = vmatpush1.xpose.msra.mxu0 %v91
    %126 = vmatprep.subr.mxu0 0.0
    %127 = vmatpush1.xpose.msra.mxu0 %v94
    %128 = vmatprep.subr.mxu0 0.0
    %129 = vmatpush1.xpose.msra.mxu0 0.0
    %130 = vmatprep.subr.mxu0 0.0
    %131 = vmatpush1.xpose.msra.mxu0 0.0
    %132 = vmatprep.subr.mxu0 0.0
    %133 = vmatpush1.xpose.msra.mxu0 0.0
    %134 = vmatprep.subr.mxu0 0.0
    %135 = vmatpush1.xpose.msra.mxu0 0.0
    %136 = vmatprep.subr.mxu0 0.0
    %137 = vmatpush1.xpose.msra.mxu0 0.0
    %138 = vmatprep.subr.mxu0 0.0
    %139 = vmatpush1.xpose.msra.mxu0 0.0
    %140 = vmatprep.subr.mxu0 0.0
    %141 = vmatpush1.xpose.msra.mxu0 0.0
    %142 = vmatprep.subr.mxu0 0.0
    %143 = vmatpush1.xpose.msra.mxu0 0.0
    %144 = vmatprep.subr.mxu0 0.0
    %145 = vmatpush1.xpose.msra.mxu0 0.0
    %146 = vmatprep.subr.mxu0 0.0
    %147 = vmatpush1.xpose.msra.mxu0 0.0
    %148 = vmatprep.subr.mxu0 0.0
    %149 = vmatpush1.xpose.msra.mxu0 0.0
    %150 = vmatprep.subr.mxu0 0.0
    %151 = vmatpush1.xpose.msra.mxu0 0.0
    %152 = vmatprep.subr.mxu0 0.0
    %153 = vmatpush1.xpose.msra.mxu0 0.0
    %154 = vmatprep.subr.mxu0 0.0
    %155 = vmatpush1.xpose.msra.mxu0 0.0
    %156 = vmatprep.subr.mxu0 0.0
    %157 = vmatpush1.xpose.msra.mxu0 0.0
    %158 = vmatprep.subr.mxu0 0.0
    %159 = vmatpush1.xpose.msra.mxu0 0.0
    %160 = vmatprep.mubr.f32.mxu0 0.0
    %161 = vmatmul.mubr.f32.gmra.mrb[0].mxu0 %v43
    %v162 = vpop.f32.mrb[0].mxu0
    %v163 = vadd.f32 0.0, %v162
    %v164 = vpop.f32.mrb[0].mxu0
    %165 = vmatprep.mubr.f32.mxu0 0.0
    %166 = vmatmul.mubr.f32.gmra.mrb[0].mxu0 %v46
    %v167 = vpop.f32.mrb[0].mxu0
    %v168 = vadd.f32 0.0, %v167
    %v169 = vpop.f32.mrb[0].mxu0
    %170 = vdwg.mxu0
    %v171 = vadd.f32 %v21, %v163
    %v172 = vadd.f32 %v22, %v168
    %173 = vst [vmem:[#allocation2] sm:$0xff] %v171
    %174 = vst [vmem:[#allocation2 + $0x8] sm:$0xff] %v172
    // Predicated region
    $region18: #{time_distributed_linear.1} parent=1 // pred_check
      %p175 = pneg %p15
    $region19: #{time_distributed_linear.1} parent=1 // pred_check_branch
      %177 = sbr.rel (%p175) target = $region21
    $region20: #{time_distributed_linear.1} parent=1 // pred_region
      %v178 = vld [vmem:[#allocation2] sm:$0xff]
      %v179 = vld [vmem:[#allocation2 + $0x8] sm:$0xff]
      %v180 = vld [vmem:[%s2] sm:$0x1]
      %v182 = vlaneseq
      %v183 = vshrl.u32 %v182, 7
      %v184 = vsub.s32 0, %v183
      %v185 = vrot.slane %v180, %v184
      %v187 = vadd.f32 %v178, %v185
      %v188 = vadd.f32 %v179, %v185
      %189 = vst [vmem:[#allocation3] sm:$0xff] %v187
      %190 = vst [vmem:[#allocation3 + $0x8] sm:$0xff] %v188
    $region21: #{time_distributed_linear.1} parent=1 // pred_fallthru
      _
    // Predicated region
    $region22: #{time_distributed_linear.1} parent=1 // pred_check
      _
    $region23: #{time_distributed_linear.1} parent=1 // pred_check_branch
      %192 = sbr.rel (0) target = $region25
    $region24: #{time_distributed_linear.1} parent=1 // pred_region
      %s194 = ssub.s32 256, 256
      %195 = vsyncadd [#allocation4], %s194
      %s196 = sshll.u32 [#allocation3], 4
      %s197 = int_to_ptr.vmem [resolvable:$true] %s196
      %202 = dma.vmem_to_hbm [thread:$0]  %s197, 256, %s3, [#allocation4], 128, 128, 8
    $region25: #{time_distributed_linear.1} parent=1 // pred_fallthru
      _
    // Predicated region
    $region26: #{time_distributed_linear.1} parent=1 // pred_check
      _
    $region27: #{time_distributed_linear.1} parent=1 // pred_check_branch
      %204 = sbr.rel (0) target = $region29
    $region28: #{time_distributed_linear.1} parent=1 // pred_region
      %205 = dma.done [#allocation4], 256
    $region29: #{time_distributed_linear.1} parent=1 // pred_fallthru
      _
    %206 = vsyncpa [#allocation4], 1

</llo_original>
